<compile_context>
chip_gen: v5e
topology: v5e:2x2
jax: 0.10.0
libtpu: 0.0.40
codegen_flags: <defaults>
</compile_context>

<pallas_src>
import functools

import jax
import jax.numpy as jnp
from jax.experimental import pallas as pl
from jax.experimental.pallas import tpu as pltpu


def _round_up(x, m):
    return ((x + m - 1) // m) * m


def _round_down(x, m):
    return (x // m) * m


def _conv1x1(w_ref, b_ref, x_ref, use_mxu):
    """(C_out, C_in) @ (C_in, thw) + bias, f32 accumulation."""
    x = x_ref[0]
    if use_mxu:
        h = jnp.dot(w_ref[...], x, preferred_element_type=jnp.float32)
    else:
        # Unrolled VPU broadcast-FMA: sum_c w[:, c] * x[c, :].
        w = w_ref[...].astype(jnp.float32)
        xf = x.astype(jnp.float32)
        c_in = xf.shape[0]
        h = w[:, 0:1] * xf[0:1, :]
        for c in range(1, c_in):
            h = h + w[:, c : c + 1] * xf[c : c + 1, :]
    return h + b_ref[...].astype(jnp.float32)


def _combine_cat_kernel(w_ref, b_ref, x_ref, y_ref, o_ref, *, c_out, use_mxu):
    # w_ref: (C_out, C_in)  resident;  b_ref: (C_out, 1)  resident
    # x_ref: (1, C_in, thw); y_ref: (1, C2, thw); o_ref: (1, C_out + C2, thw)
    h = _conv1x1(w_ref, b_ref, x_ref, use_mxu)
    # Two direct sub-block stores (no in-kernel concatenate / sublane relayout).
    o_ref[0, :c_out, :] = h.astype(o_ref.dtype)
    o_ref[0, c_out:, :] = y_ref[0].astype(o_ref.dtype)


def _combine_sum_kernel(w_ref, b_ref, x_ref, y_ref, o_ref, *, use_mxu):
    # o_ref: (1, C_out, thw); y added in f32 before the single store.
    h = _conv1x1(w_ref, b_ref, x_ref, use_mxu)
    o_ref[0] = (h + y_ref[0].astype(jnp.float32)).astype(o_ref.dtype)


# ~2 MiB of HBM traffic per grid step (well above the ~0.35 us/step overhead
# break-even on v5e/v6e and the ~1.1 MB break-even on v7x's 3.2 TB/s HBM).
_TARGET_STEP_BYTES = 2 << 20
# Budget for the double-buffered in/out blocks (v7x has only 64 MiB physical VMEM).
_VMEM_BLOCK_BUDGET = 40 << 20


def _choose_spatial_tile(HW, per_lane_bytes, N):
    vmem_cap = max(128, _round_down(_VMEM_BLOCK_BUDGET // (2 * per_lane_bytes), 128))
    target = max(128, _round_down(_TARGET_STEP_BYTES // per_lane_bytes, 128))
    target = min(target, vmem_cap)

    if HW <= target:
        # Full spatial extent: always a legal block (equals the full dim).
        # Note: HW < 128 falls into the masked-store regime; unavoidable here.
        thw, n_hw = HW, 1
    else:
        # Balanced split into 128-multiple blocks (no nearly-empty masked tail).
        n_blocks = pl.cdiv(HW, target)
        thw = min(_round_up(pl.cdiv(HW, n_blocks), 128), vmem_cap)
        n_hw = pl.cdiv(HW, thw)

    # v7x megacore: ensure >= 2 parallel grid steps so both TCs get work.
    if N * n_hw < 2 and HW >= 256:
        thw = _round_up(pl.cdiv(HW, 2), 128)
        n_hw = pl.cdiv(HW, thw)
    return thw, n_hw


def combine_forward(x, y, weight, bias, method="cat"):
    """Fused Pallas implementation of Combine.forward (NCHW in, NCHW out).

    x:      (N, C_in, H, W)
    y:      (N, C2,   H, W)
    weight: (C_out, C_in) or (C_out, C_in, 1, 1)
    bias:   (C_out,)
    """
    if weight.ndim == 4:
        weight = weight.reshape(weight.shape[0], weight.shape[1])
    N, C_in, H, W = x.shape
    Ny, C2, Hy, Wy = y.shape
    assert (N, H, W) == (Ny, Hy, Wy), "x and y must share batch/spatial dims"
    C_out = weight.shape[0]
    assert weight.shape == (C_out, C_in)

    if method == "cat":
        C_tot = C_out + C2
    elif method == "sum":
        assert C2 == C_out, "'sum' requires y channels == conv output channels"
        C_tot = C_out
    else:
        raise ValueError(f"Method {method} not recognized.")

    HW = H * W
    out_dtype = jnp.result_type(x.dtype, y.dtype)

    # Contiguous trailing-dim merges: metadata-only reshapes, no HBM traffic.
    x3 = x.reshape(N, C_in, HW)
    y3 = y.reshape(N, C2, HW)
    b2 = bias.reshape(C_out, 1).astype(jnp.float32)
    # bf16 activations -> bf16 weights (MXU/VPU native on v6e/v7x); accumulation is f32.
    if x.dtype == jnp.bfloat16:
        weight = weight.astype(jnp.bfloat16)

    per_lane_bytes = (
        C_in * x3.dtype.itemsize
        + C2 * y3.dtype.itemsize
        + C_tot * jnp.dtype(out_dtype).itemsize
    )
    thw, n_hw = _choose_spatial_tile(HW, per_lane_bytes, N)

    # Explicit scoped-VMEM limit: double-buffered blocks + resident weight/bias
    # + headroom, clamped to [16, 48] MiB (v5e default is only 16 MiB scoped;
    # v7x physical is 64 MiB, so never ask for more than ~48 MiB).
    block_bytes = 2 * per_lane_bytes * thw
    const_bytes = 2 * (weight.size * weight.dtype.itemsize + C_out * 4)
    vmem_limit = int(min(48 << 20, max(16 << 20, block_bytes + const_bytes + (8 << 20))))

    use_mxu = C_in > 8
    if method == "cat":
        kernel = functools.partial(_combine_cat_kernel, c_out=C_out, use_mxu=use_mxu)
    else:
        kernel = functools.partial(_combine_sum_kernel, use_mxu=use_mxu)

    out3 = pl.pallas_call(
        kernel,
        out_shape=jax.ShapeDtypeStruct((N, C_tot, HW), out_dtype),
        grid_spec=pltpu.PrefetchScalarGridSpec(
            num_scalar_prefetch=0,
            grid=(N, n_hw),
            in_specs=[
                pl.BlockSpec((C_out, C_in), lambda n, j: (0, 0)),  # weight (resident)
                pl.BlockSpec((C_out, 1), lambda n, j: (0, 0)),     # bias   (resident)
                pl.BlockSpec((1, C_in, thw), lambda n, j: (n, 0, j)),
                pl.BlockSpec((1, C2, thw), lambda n, j: (n, 0, j)),
            ],
            out_specs=pl.BlockSpec((1, C_tot, thw), lambda n, j: (n, 0, j)),
        ),
        compiler_params=pltpu.CompilerParams(
            dimension_semantics=("parallel", "parallel"),
            vmem_limit_bytes=vmem_limit,
        ),
    )(weight, b2, x3, y3)

    return out3.reshape(N, C_tot, H, W)


def _reference(x, y, weight, bias, method="cat"):
    h = jnp.einsum("nchw,oc->nohw", x, weight) + bias[None, :, None, None]
    if method == "cat":
        return jnp.concatenate([h, y], axis=1)
    return h + y


if __name__ == "__main__":
    key = jax.random.PRNGKey(0)
    k_x, k_y, k_w, k_b = jax.random.split(key, 4)

    # Module config: Combine(dim1=4, dim2=4), small spatial.
    N, dim1, dim2, H, W = 2, 4, 4, 16, 16

    x = jax.random.normal(k_x, (N, dim1, H, W), dtype=jnp.float32)
    y = jax.random.normal(k_y, (N, dim2, H, W), dtype=jnp.float32)

    # Conv2d(dim1, dim2, kernel_size=1): weight (dim2, dim1, 1, 1) -> (dim2, dim1)
    weight = jax.random.normal(k_w, (dim2, dim1), dtype=jnp.float32) * 0.1
    bias = jax.random.normal(k_b, (dim2,), dtype=jnp.float32) * 0.1

    # method='cat'
    out = combine_forward(x, y, weight, bias, method="cat")
    out = jax.block_until_ready(out)
    ref = _reference(x, y, weight, bias, method="cat")
    assert out.shape == (N, dim2 + dim2, H, W), out.shape
    assert jnp.allclose(out, ref, atol=1e-5, rtol=1e-5), "cat mismatch vs reference"

    # method='sum'
    out_sum = combine_forward(x, y, weight, bias, method="sum")
    out_sum = jax.block_until_ready(out_sum)
    ref_sum = _reference(x, y, weight, bias, method="sum")
    assert out_sum.shape == (N, dim2, H, W), out_sum.shape
    assert jnp.allclose(out_sum, ref_sum, atol=1e-5, rtol=1e-5), "sum mismatch vs reference"

    print("KERNEL_OK")
</pallas_src>

<mosaic_0001>
module attributes {stable_mosaic.version = 11 : i64} {
  func.func @_combine_cat_kernel(%arg0: i32, %arg1: i32, %arg2: memref<4x4xf32, #tpu.memory_space<vmem>>, %arg3: memref<4x1xf32, #tpu.memory_space<vmem>>, %arg4: memref<1x4x256xf32, #tpu.memory_space<vmem>>, %arg5: memref<1x4x256xf32, #tpu.memory_space<vmem>>, %arg6: memref<1x8x256xf32, #tpu.memory_space<vmem>>) attributes {dimension_semantics = [#tpu.dimension_semantics<parallel>, #tpu.dimension_semantics<parallel>], iteration_bounds = array<i64: 2, 1>, scalar_prefetch = 0 : i64, scratch_operands = 0 : i64, tpu.core_type = #tpu.core_type<tc>, window_params = [{pipeline_mode = #tpu.pipeline_mode<synchronous>, transform_indices = @transform_0, window_bounds = array<i64: 4, 4>}, {pipeline_mode = #tpu.pipeline_mode<synchronous>, transform_indices = @transform_1, window_bounds = array<i64: 4, 1>}, {transform_indices = @transform_2, window_bounds = array<i64: 1, 4, 256>}, {transform_indices = @transform_3, window_bounds = array<i64: 1, 4, 256>}, {transform_indices = @transform_4, window_bounds = array<i64: 1, 8, 256>}]} {
    %c0 = arith.constant 0 : index
    %c0_0 = arith.constant 0 : index
    %c0_1 = arith.constant 0 : index
    %0 = vector.load %arg4[%c0, %c0_0, %c0_1] : memref<1x4x256xf32, #tpu.memory_space<vmem>>, vector<1x4x256xf32>
    %1 = vector.shape_cast %0 : vector<1x4x256xf32> to vector<4x256xf32>
    %c0_2 = arith.constant 0 : index
    %c0_3 = arith.constant 0 : index
    %2 = vector.load %arg2[%c0_2, %c0_3] : memref<4x4xf32, #tpu.memory_space<vmem>>, vector<4x4xf32>
    %3 = vector.extract_strided_slice %2 {offsets = [0, 0], sizes = [4, 1], strides = [1, 1]} : vector<4x4xf32> to vector<4x1xf32>
    %4 = vector.extract_strided_slice %1 {offsets = [0, 0], sizes = [1, 256], strides = [1, 1]} : vector<4x256xf32> to vector<1x256xf32>
    %5 = vector.broadcast %3 : vector<4x1xf32> to vector<4x256xf32>
    %6 = vector.broadcast %4 : vector<1x256xf32> to vector<4x256xf32>
    %7 = arith.mulf %5, %6 : vector<4x256xf32>
    %8 = vector.extract_strided_slice %2 {offsets = [0, 1], sizes = [4, 1], strides = [1, 1]} : vector<4x4xf32> to vector<4x1xf32>
    %9 = vector.extract_strided_slice %1 {offsets = [1, 0], sizes = [1, 256], strides = [1, 1]} : vector<4x256xf32> to vector<1x256xf32>
    %10 = vector.broadcast %8 : vector<4x1xf32> to vector<4x256xf32>
    %11 = vector.broadcast %9 : vector<1x256xf32> to vector<4x256xf32>
    %12 = arith.mulf %10, %11 : vector<4x256xf32>
    %13 = arith.addf %7, %12 : vector<4x256xf32>
    %14 = vector.extract_strided_slice %2 {offsets = [0, 2], sizes = [4, 1], strides = [1, 1]} : vector<4x4xf32> to vector<4x1xf32>
    %15 = vector.extract_strided_slice %1 {offsets = [2, 0], sizes = [1, 256], strides = [1, 1]} : vector<4x256xf32> to vector<1x256xf32>
    %16 = vector.broadcast %14 : vector<4x1xf32> to vector<4x256xf32>
    %17 = vector.broadcast %15 : vector<1x256xf32> to vector<4x256xf32>
    %18 = arith.mulf %16, %17 : vector<4x256xf32>
    %19 = arith.addf %13, %18 : vector<4x256xf32>
    %20 = vector.extract_strided_slice %2 {offsets = [0, 3], sizes = [4, 1], strides = [1, 1]} : vector<4x4xf32> to vector<4x1xf32>
    %21 = vector.extract_strided_slice %1 {offsets = [3, 0], sizes = [1, 256], strides = [1, 1]} : vector<4x256xf32> to vector<1x256xf32>
    %22 = vector.broadcast %20 : vector<4x1xf32> to vector<4x256xf32>
    %23 = vector.broadcast %21 : vector<1x256xf32> to vector<4x256xf32>
    %24 = arith.mulf %22, %23 : vector<4x256xf32>
    %25 = arith.addf %19, %24 : vector<4x256xf32>
    %c0_4 = arith.constant 0 : index
    %c0_5 = arith.constant 0 : index
    %26 = vector.load %arg3[%c0_4, %c0_5] : memref<4x1xf32, #tpu.memory_space<vmem>>, vector<4x1xf32>
    %27 = vector.broadcast %26 : vector<4x1xf32> to vector<4x256xf32>
    %28 = arith.addf %25, %27 : vector<4x256xf32>
    %c0_6 = arith.constant 0 : index
    %c0_7 = arith.constant 0 : index
    %c0_8 = arith.constant 0 : index
    %29 = vector.load %arg6[%c0_6, %c0_7, %c0_8] : memref<1x8x256xf32, #tpu.memory_space<vmem>>, vector<1x4x256xf32>
    %30 = vector.shape_cast %29 : vector<1x4x256xf32> to vector<4x256xf32>
    %31 = vector.shape_cast %28 : vector<4x256xf32> to vector<1x4x256xf32>
    tpu.vector_store %arg6[%c0_6, %c0_7, %c0_8], %31 {strides = array<i32>} : memref<1x8x256xf32, #tpu.memory_space<vmem>>, vector<1x4x256xf32>,
    %c0_9 = arith.constant 0 : index
    %c0_10 = arith.constant 0 : index
    %c0_11 = arith.constant 0 : index
    %32 = vector.load %arg5[%c0_9, %c0_10, %c0_11] : memref<1x4x256xf32, #tpu.memory_space<vmem>>, vector<1x4x256xf32>
    %33 = vector.shape_cast %32 : vector<1x4x256xf32> to vector<4x256xf32>
    %c0_12 = arith.constant 0 : index
    %c4 = arith.constant 4 : index
    %c0_13 = arith.constant 0 : index
    %34 = vector.load %arg6[%c0_12, %c4, %c0_13] : memref<1x8x256xf32, #tpu.memory_space<vmem>>, vector<1x4x256xf32>
    %35 = vector.shape_cast %34 : vector<1x4x256xf32> to vector<4x256xf32>
    %36 = vector.shape_cast %33 : vector<4x256xf32> to vector<1x4x256xf32>
    tpu.vector_store %arg6[%c0_12, %c4, %c0_13], %36 {strides = array<i32>} : memref<1x8x256xf32, #tpu.memory_space<vmem>>, vector<1x4x256xf32>,
    return
  }
  func.func @transform_0(%arg0: i32, %arg1: i32) -> (i32, i32) {
    %c0_i32 = arith.constant 0 : i32
    %c0_i32_0 = arith.constant 0 : i32
    %c0_i32_1 = arith.constant 0 : i32
    return %c0_i32, %c0_i32_0 : i32, i32
  }
  func.func @transform_1(%arg0: i32, %arg1: i32) -> (i32, i32) {
    %c0_i32 = arith.constant 0 : i32
    %c0_i32_0 = arith.constant 0 : i32
    %c0_i32_1 = arith.constant 0 : i32
    return %c0_i32, %c0_i32_0 : i32, i32
  }
  func.func @transform_2(%arg0: i32, %arg1: i32) -> (i32, i32, i32) {
    %c0_i32 = arith.constant 0 : i32
    %c0_i32_0 = arith.constant 0 : i32
    return %arg0, %c0_i32, %arg1 : i32, i32, i32
  }
  func.func @transform_3(%arg0: i32, %arg1: i32) -> (i32, i32, i32) {
    %c0_i32 = arith.constant 0 : i32
    %c0_i32_0 = arith.constant 0 : i32
    return %arg0, %c0_i32, %arg1 : i32, i32, i32
  }
  func.func @transform_4(%arg0: i32, %arg1: i32) -> (i32, i32, i32) {
    %c0_i32 = arith.constant 0 : i32
    %c0_i32_0 = arith.constant 0 : i32
    return %arg0, %c0_i32, %arg1 : i32, i32, i32
  }
}

</mosaic_0001>

<llo_original>
// kernel: tpu_custom_call.1
$region0: #{tpu_custom_call.1}
  #allocation0 [shape = 'u32[]', space=smem, size = 0x4, offset = 0x4, fixed_abs, tag = 'smem constant byte address 0x4 - core index']
  #allocation1 [shape = 'u32[72,128]{1,0:T(1,128)}', space=vmem, size = 0x9000, scoped, tag = 'internal scratch']
  %s0 = inlined_call_operand.vmem [shape: f32[4,4], index: 0, kind: input, shape index: {}]
  %s1 = inlined_call_operand.vmem [shape: f32[4,1], index: 1, kind: input, shape index: {}]
  %s2 = inlined_call_operand.hbm [shape: f32[2,4,256], index: 2, kind: input, shape index: {}]
  %s3 = inlined_call_operand.hbm [shape: f32[2,4,256], index: 3, kind: input, shape index: {}]
  %s4 = inlined_call_operand.hbm [shape: f32[2,8,256], index: 4, kind: output, shape index: {}]
  %s5 = sld [smem:[#allocation0]]
  $region57: #{tpu_custom_call.1} parent=0
    _
  %s7 = ssub.s32 1, %s5
  %s8 = scalar_select 0, %s7, %s5
  $region1: #{tpu_custom_call.1} parent=0
    #allocation2 [shape = 'u8[8192]{0}', space=vmem, size = 0x2000, scoped, tag = 'input window, operand 2']
    #allocation3 [shape = 's32[2]{0}', space=sflag, size = 0x8, scoped, tag = 'scoped memory for tpu_custom_call.1']
    #allocation4 [shape = 's32[2]{0}', space=sflag, size = 0x8, scoped, tag = 'scoped memory for tpu_custom_call.1']
    #allocation5 [shape = 'u8[8192]{0}', space=vmem, size = 0x2000, scoped, tag = 'input window, operand 3']
    #allocation6 [shape = 's32[2]{0}', space=sflag, size = 0x8, scoped, tag = 'scoped memory for tpu_custom_call.1']
    #allocation7 [shape = 'u8[16384]{0}', space=vmem, size = 0x4000, scoped, tag = 'output window, operand 0']
    %9 = vsyncpa [#allocation3], 0
    %s10 = scalar_lea.sflag [#allocation3], 1
    %11 = vsyncpa %s10, 0
    %12 = vsyncpa [#allocation6], 0
    %s13 = scalar_lea.sflag [#allocation6], 1
    %14 = vsyncpa %s13, 0
    %15 = vsyncpa [#allocation4], 0
    %s16 = scalar_lea.sflag [#allocation4], 1
    %17 = vsyncpa %s16, 0
    loop: start=0, step=1, limit=4
    $region2: #{tpu_custom_call.1} parent=1 // loop_pre_header
      _
    $region3: #{tpu_custom_call.1} parent=1 // loop_header
      %s19 = sphi 0, %s23
      %p20 = scmp.ge.s32.totalorder %s19, 4
      %s26 = sphi 0, %s38
      %s27 = sphi 0, %s34
      %s28 = sphi 0, %s26
      %s29 = sphi 0, %s27
      %s30 = sphi 0, %s28
      %s31 = sphi 0, %s29
      %s39 = sphi 0, %s39
      %s41 = sphi 0, %s39
      %s42 = sphi 0, %s41
      %s56 = sphi 0, %s42
      %s60 = sphi 0, %s60
      %s62 = sphi 0, %s60
      %s63 = sphi 0, %s62
      %s77 = sphi 0, %s63
      %s85 = sphi 0, %s87
      %s88 = sphi 0, %s85
      %s89 = sphi 0, %s88
      %s105 = sphi 0, %s89
      %s113 = sphi 0, %s115
      %s116 = sphi 0, %s113
      %s117 = sphi 0, %s116
      %s133 = sphi 0, %s117
      %s141 = sphi 0, %s143
      %s144 = sphi 0, %s141
      %s145 = sphi 0, %s144
      %s161 = sphi 0, %s145
    $region4: #{tpu_custom_call.1} parent=1 // loop_header_branch
      %22 = sbr.rel (%p20) target = $region8
    $region5: #{tpu_custom_call.1} parent=1 // loop_body
      %s24 = ssub.s32 %s19, 1
      %s25 = ssub.s32 %s19, 2
      %s32 = sadd.s32 1, %s27
      %p33 = scmp.ge.s32.totalorder %s32, 1
      %s34 = scalar_select %p33, 0, %s32
      %s35 = sadd.s32 1, %s26
      %s36 = scalar_select %p33, %s35, %s26
      %p37 = scmp.ge.s32.totalorder %s36, 2
      %s38 = scalar_select %p37, 0, %s36
      %s40 = sadd.s32 %s39, 1
      %p43 = scmp.eq.s32.totalorder %s19, 1
      %p44 = scmp.ne.s32.totalorder %s39, %s41
      %p45 = scmp.eq.s32.totalorder %s19, 0
      %p46 = por %p44, %p45
      %p47 = scmp.ne.s32.totalorder %s39, %s41
      %p48 = scmp.eq.s32.totalorder %s24, 1
      %p49 = por %p47, %p48
      %p50 = scmp.ne.s32.totalorder %s41, %s42
      %p51 = scmp.eq.s32.totalorder %s24, 0
      %p52 = por %p50, %p51
      %p53 = scmp.ne.s32.totalorder %s41, %s42
      %p54 = scmp.eq.s32.totalorder %s25, 1
      %p55 = por %p53, %p54
      %p57 = scmp.ne.s32.totalorder %s42, %s56
      %p58 = scmp.eq.s32.totalorder %s25, 0
      %p59 = por %p57, %p58
      %s61 = sadd.s32 %s60, 1
      %p64 = scmp.eq.s32.totalorder %s19, 1
      %p65 = scmp.ne.s32.totalorder %s60, %s62
      %p66 = scmp.eq.s32.totalorder %s19, 0
      %p67 = por %p65, %p66
      %p68 = scmp.ne.s32.totalorder %s60, %s62
      %p69 = scmp.eq.s32.totalorder %s24, 1
      %p70 = por %p68, %p69
      %p71 = scmp.ne.s32.totalorder %s62, %s63
      %p72 = scmp.eq.s32.totalorder %s24, 0
      %p73 = por %p71, %p72
      %p74 = scmp.ne.s32.totalorder %s62, %s63
      %p75 = scmp.eq.s32.totalorder %s25, 1
      %p76 = por %p74, %p75
      %p78 = scmp.ne.s32.totalorder %s63, %s77
      %p79 = scmp.eq.s32.totalorder %s25, 0
      %p80 = por %p78, %p79
      %s81 = ssub.s32 %s26, %s38
      %s82 = ssub.s32 %s27, %s34
      %s83 = sor.u32 %s81, %s82
      %p84 = scmp.eq.s32.totalorder %s83, 0
      %s86 = sadd.s32 %s85, 1
      %s87 = scalar_select %p84, %s85, %s86
      %p90 = pneg %p84
      %p91 = scmp.eq.s32.totalorder %s19, 1
      %p92 = por %p90, %p91
      %p93 = scmp.ne.s32.totalorder %s85, %s88
      %p94 = scmp.eq.s32.totalorder %s19, 0
      %p95 = por %p93, %p94
      %p96 = scmp.ne.s32.totalorder %s85, %s88
      %p97 = scmp.eq.s32.totalorder %s24, 1
      %p98 = por %p96, %p97
      %p99 = scmp.ne.s32.totalorder %s88, %s89
      %p100 = scmp.eq.s32.totalorder %s24, 0
      %p101 = por %p99, %p100
      %p102 = scmp.ne.s32.totalorder %s88, %s89
      %p103 = scmp.eq.s32.totalorder %s25, 1
      %p104 = por %p102, %p103
      %p106 = scmp.ne.s32.totalorder %s89, %s105
      %p107 = scmp.eq.s32.totalorder %s25, 0
      %p108 = por %p106, %p107
      %s109 = ssub.s32 %s26, %s38
      %s110 = ssub.s32 %s27, %s34
      %s111 = sor.u32 %s109, %s110
      %p112 = scmp.eq.s32.totalorder %s111, 0
      %s114 = sadd.s32 %s113, 1
      %s115 = scalar_select %p112, %s113, %s114
      %p118 = pneg %p112
      %p119 = scmp.eq.s32.totalorder %s19, 1
      %p120 = por %p118, %p119
      %p121 = scmp.ne.s32.totalorder %s113, %s116
      %p122 = scmp.eq.s32.totalorder %s19, 0
      %p123 = por %p121, %p122
      %p124 = scmp.ne.s32.totalorder %s113, %s116
      %p125 = scmp.eq.s32.totalorder %s24, 1
      %p126 = por %p124, %p125
      %p127 = scmp.ne.s32.totalorder %s116, %s117
      %p128 = scmp.eq.s32.totalorder %s24, 0
      %p129 = por %p127, %p128
      %p130 = scmp.ne.s32.totalorder %s116, %s117
      %p131 = scmp.eq.s32.totalorder %s25, 1
      %p132 = por %p130, %p131
      %p134 = scmp.ne.s32.totalorder %s117, %s133
      %p135 = scmp.eq.s32.totalorder %s25, 0
      %p136 = por %p134, %p135
      %s137 = ssub.s32 %s26, %s38
      %s138 = ssub.s32 %s27, %s34
      %s139 = sor.u32 %s137, %s138
      %p140 = scmp.eq.s32.totalorder %s139, 0
      %s142 = sadd.s32 %s141, 1
      %s143 = scalar_select %p140, %s141, %s142
      %p146 = pneg %p140
      %p147 = scmp.eq.s32.totalorder %s19, 1
      %p148 = por %p146, %p147
      %p149 = scmp.ne.s32.totalorder %s141, %s144
      %p150 = scmp.eq.s32.totalorder %s19, 0
      %p151 = por %p149, %p150
      %p152 = scmp.ne.s32.totalorder %s141, %s144
      %p153 = scmp.eq.s32.totalorder %s24, 1
      %p154 = por %p152, %p153
      %p155 = scmp.ne.s32.totalorder %s144, %s145
      %p156 = scmp.eq.s32.totalorder %s24, 0
      %p157 = por %p155, %p156
      %p158 = scmp.ne.s32.totalorder %s144, %s145
      %p159 = scmp.eq.s32.totalorder %s25, 1
      %p160 = por %p158, %p159
      %p162 = scmp.ne.s32.totalorder %s145, %s161
      %p163 = scmp.eq.s32.totalorder %s25, 0
      %p164 = por %p162, %p163
      %p165 = scmp.le.s32.totalorder 1, %s19
      %p166 = scmp.lt.s32.totalorder %s19, 3
      %p167 = pnand %p165, %p166
      %p168 = pneg %p167
      // Predicated region
      $region9: #{tpu_custom_call.1} parent=5 // pred_check
        _
      $region10: #{tpu_custom_call.1} parent=5 // pred_check_branch
        %170 = sbr.rel (%p167) target = $region12
      $region11: #{tpu_custom_call.1} parent=5 // pred_region
        %s171 = ssub.s32 %s19, 1
        // Predicated region
        $region13: #{tpu_custom_call.1} parent=11 // pred_check
          %p172 = pneg %p52
        $region14: #{tpu_custom_call.1} parent=11 // pred_check_branch
          %174 = sbr.rel (%p172) target = $region16
        $region15: #{tpu_custom_call.1} parent=11 // pred_region
          _
        $region16: #{tpu_custom_call.1} parent=11 // pred_fallthru
          _
        // Predicated region
        $region17: #{tpu_custom_call.1} parent=11 // pred_check
          %p175 = pneg %p73
        $region18: #{tpu_custom_call.1} parent=11 // pred_check_branch
          %177 = sbr.rel (%p175) target = $region20
        $region19: #{tpu_custom_call.1} parent=11 // pred_region
          _
        $region20: #{tpu_custom_call.1} parent=11 // pred_fallthru
          _
      $region12: #{tpu_custom_call.1} parent=5 // pred_fallthru
        _
      %p178 = scmp.lt.s32.totalorder %s19, 2
      // Predicated region
      $region21: #{tpu_custom_call.1} parent=5 // pred_check
        %p179 = pneg %p178
      $region22: #{tpu_custom_call.1} parent=5 // pred_check_branch
        %181 = sbr.rel (%p179) target = $region24
      $region23: #{tpu_custom_call.1} parent=5 // pred_region
        // Predicated region
        $region25: #{tpu_custom_call.1} parent=23 // pred_check
          %p182 = pneg %p95
        $region26: #{tpu_custom_call.1} parent=23 // pred_check_branch
          %184 = sbr.rel (%p182) target = $region28
        $region27: #{tpu_custom_call.1} parent=23 // pred_region
          %s185 = sand.u32 %s85, 1
          %s186 = scalar_lea.sflag [#allocation3], %s185
          %s187 = sand.u32 %s85, 1
          %s188 = smul.addr %s187, 8
          %s189 = scalar_lea.vmem [#allocation2], %s188
          %s190 = smul.u32 2, %s27
          %192 = vsyncadd %s186, 0
          %s193 = smul.addr %s26, 2
          %s194 = sadd.s32 %s190, %s193
          %s195 = smul.addr %s194, 4
          %s196 = scalar_lea.hbm %s2, %s195
          %s198 = sshll.u32 %s196, 4
          %s199 = int_to_ptr.hbm [resolvable:$true] %s198
          %s200 = sshll.u32 %s189, 4
          %s201 = int_to_ptr.vmem [resolvable:$true] %s200
          %203 = dma.hbm_to_vmem [thread:$0]  %s199, 128, %s201, %s186
        $region28: #{tpu_custom_call.1} parent=23 // pred_fallthru
          _
        // Predicated region
        $region29: #{tpu_custom_call.1} parent=23 // pred_check
          %p204 = pneg %p123
        $region30: #{tpu_custom_call.1} parent=23 // pred_check_branch
          %206 = sbr.rel (%p204) target = $region32
        $region31: #{tpu_custom_call.1} parent=23 // pred_region
          %s207 = sand.u32 %s113, 1
          %s208 = scalar_lea.sflag [#allocation6], %s207
          %s209 = sand.u32 %s113, 1
          %s210 = smul.addr %s209, 8
          %s211 = scalar_lea.vmem [#allocation5], %s210
          %s212 = smul.u32 2, %s27
          %214 = vsyncadd %s208, 0
          %s215 = smul.addr %s26, 2
          %s216 = sadd.s32 %s212, %s215
          %s217 = smul.addr %s216, 4
          %s218 = scalar_lea.hbm %s3, %s217
          %s220 = sshll.u32 %s218, 4
          %s221 = int_to_ptr.hbm [resolvable:$true] %s220
          %s222 = sshll.u32 %s211, 4
          %s223 = int_to_ptr.vmem [resolvable:$true] %s222
          %225 = dma.hbm_to_vmem [thread:$0]  %s221, 128, %s223, %s208
        $region32: #{tpu_custom_call.1} parent=23 // pred_fallthru
          _
      $region24: #{tpu_custom_call.1} parent=5 // pred_fallthru
        _
      %p226 = scmp.le.s32.totalorder 1, %s19
      %p227 = scmp.lt.s32.totalorder %s19, 3
      %p228 = pnand %p226, %p227
      %p229 = pneg %p228
      // Predicated region
      $region33: #{tpu_custom_call.1} parent=5 // pred_check
        _
      $region34: #{tpu_custom_call.1} parent=5 // pred_check_branch
        %231 = sbr.rel (%p228) target = $region36
      $region35: #{tpu_custom_call.1} parent=5 // pred_region
        %s232 = ssub.s32 %s19, 1
        %s233 = sand.u32 %s88, 1
        %s234 = scalar_lea.sflag [#allocation3], %s233
        %s235 = sand.u32 %s88, 1
        %s236 = smul.addr %s235, 8
        %s237 = scalar_lea.vmem [#allocation2], %s236
        // Predicated region
        $region37: #{tpu_custom_call.1} parent=35 // pred_check
          %p238 = pneg %p101
        $region38: #{tpu_custom_call.1} parent=35 // pred_check_branch
          %240 = sbr.rel (%p238) target = $region40
        $region39: #{tpu_custom_call.1} parent=35 // pred_region
          %242 = dma.done %s234, 128
        $region40: #{tpu_custom_call.1} parent=35 // pred_fallthru
          _
        %s243 = sand.u32 %s116, 1
        %s244 = scalar_lea.sflag [#allocation6], %s243
        %s245 = sand.u32 %s116, 1
        %s246 = smul.addr %s245, 8
        %s247 = scalar_lea.vmem [#allocation5], %s246
        // Predicated region
        $region41: #{tpu_custom_call.1} parent=35 // pred_check
          %p248 = pneg %p129
        $region42: #{tpu_custom_call.1} parent=35 // pred_check_branch
          %250 = sbr.rel (%p248) target = $region44
        $region43: #{tpu_custom_call.1} parent=35 // pred_region
          %252 = dma.done %s244, 128
        $region44: #{tpu_custom_call.1} parent=35 // pred_fallthru
          _
        %p253 = pneg %p52
        %p254 = pneg %p49
        %p255 = pneg %p73
        %p256 = pneg %p70
        %s257 = sand.u32 %s88, 1
        %s258 = scalar_lea.sflag [#allocation3], %s257
        %s259 = sand.u32 %s88, 1
        %s260 = smul.addr %s259, 8
        %s261 = scalar_lea.vmem [#allocation2], %s260
        %p262 = pneg %p101
        %p263 = pneg %p98
        %s264 = sand.u32 %s116, 1
        %s265 = scalar_lea.sflag [#allocation6], %s264
        %s266 = sand.u32 %s116, 1
        %s267 = smul.addr %s266, 8
        %s268 = scalar_lea.vmem [#allocation5], %s267
        %p269 = pneg %p129
        %p270 = pneg %p126
        %p271 = pneg %p157
        %p272 = pneg %p154
        %s273 = sand.u32 %s144, 1
        %s274 = scalar_lea.sflag [#allocation4], %s273
        %s275 = sand.u32 %s144, 1
        %s276 = smul.addr %s275, 16
        %s277 = scalar_lea.vmem [#allocation7], %s276
        %s278 = smul.u32 2, %s29
        %s279 = smul.u32 2, %s29
        %s280 = smul.u32 2, %s29
        %v281 = vld [vmem:[%s237] sm:$0xff]
        %v282 = vld [vmem:[%s0] sm:$0xf]
        %284 = vset.pattern.permute.xlu0 0
        %285 = vperm.xlu0 %284, %v282
        %v286 = vpop.permute.xlu0 %285
        %v289 = vperm.slane %v281, 0
        %v290 = vperm.slane %v281, 4
        %v293 = vperm.slane %v289, 0
        %v294 = vperm.slane %v290, 0
        %v295 = vmul.f32 %v286, %v293
        %v296 = vmul.f32 %v286, %v294
        %297 = vset.pattern.permute.xlu0 1
        %298 = vperm.xlu0 %297, %v282
        %v299 = vpop.permute.xlu0 %298
        %v301 = vperm.slane %v281, 1
        %v302 = vperm.slane %v281, 5
        %v305 = vperm.slane %v301, 1
        %v306 = vperm.slane %v302, 1
        %v307 = vmul.f32 %v299, %v305
        %v308 = vmul.f32 %v299, %v306
        %v309 = vadd.f32 %v295, %v307
        %v310 = vadd.f32 %v296, %v308
        %311 = vset.pattern.permute.xlu0 2
        %312 = vperm.xlu0 %311, %v282
        %v313 = vpop.permute.xlu0 %312
        %v315 = vperm.slane %v281, 2
        %v316 = vperm.slane %v281, 6
        %v319 = vperm.slane %v315, 2
        %v320 = vperm.slane %v316, 2
        %v321 = vmul.f32 %v313, %v319
        %v322 = vmul.f32 %v313, %v320
        %v323 = vadd.f32 %v309, %v321
        %v324 = vadd.f32 %v310, %v322
        %325 = vset.pattern.permute.xlu0 3
        %326 = vperm.xlu0 %325, %v282
        %v327 = vpop.permute.xlu0 %326
        %v329 = vperm.slane %v281, 3
        %v330 = vperm.slane %v281, 7
        %v333 = vperm.slane %v329, 3
        %v334 = vperm.slane %v330, 3
        %v335 = vmul.f32 %v327, %v333
        %v336 = vmul.f32 %v327, %v334
        %v337 = vadd.f32 %v323, %v335
        %v338 = vadd.f32 %v324, %v336
        %v339 = vld [vmem:[%s1] sm:$0xf]
        %341 = vset.pattern.permute.xlu0 0
        %342 = vperm.xlu0 %341, %v339
        %v343 = vpop.permute.xlu0 %342
        %v345 = vadd.f32 %v337, %v343
        %v346 = vadd.f32 %v338, %v343
        %347 = vst [vmem:[%s277] sm:$0xf] %v345
        %348 = vst [vmem:[%s277 + $0x8] sm:$0xf] %v346
        %v349 = vld [vmem:[%s247] sm:$0xff]
        %s351 = scalar_lea.vmem [#allocation1], 1
        %352 = vst [vmem:[%s351] ss:$2 sm:$0xff] %v349
        %v353 = vld.sshfl [vmem:[#allocation1] sm:$0xff pattern:$0x75316420]
        %v354 = vld.sshfl [vmem:[#allocation1 + $0x8] sm:$0xff pattern:$0x75316420]
        %357 = vst [vmem:[%s277] sm:$0xf0] %v353
        %358 = vst [vmem:[%s277 + $0x8] sm:$0xf0] %v354
        %s359 = sand.u32 %s144, 1
        %s360 = scalar_lea.sflag [#allocation4], %s359
        %s361 = sand.u32 %s144, 1
        %s362 = smul.addr %s361, 16
        %s363 = scalar_lea.vmem [#allocation7], %s362
        // Predicated region
        $region45: #{tpu_custom_call.1} parent=35 // pred_check
          %p364 = pneg %p154
        $region46: #{tpu_custom_call.1} parent=35 // pred_check_branch
          %366 = sbr.rel (%p364) target = $region48
        $region47: #{tpu_custom_call.1} parent=35 // pred_region
          %s367 = smul.u32 2, %s29
          %369 = vsyncadd %s360, 0
          %s370 = smul.addr %s28, 2
          %s371 = sadd.s32 %s367, %s370
          %s372 = smul.addr %s371, 8
          %s373 = scalar_lea.hbm %s4, %s372
          %s375 = sshll.u32 %s363, 4
          %s376 = int_to_ptr.vmem [resolvable:$true] %s375
          %s377 = sshll.u32 %s373, 4
          %s378 = int_to_ptr.hbm [resolvable:$true] %s377
          %380 = dma.vmem_to_hbm [thread:$0]  %s376, 256, %s378, %s360
        $region48: #{tpu_custom_call.1} parent=35 // pred_fallthru
          _
      $region36: #{tpu_custom_call.1} parent=5 // pred_fallthru
        _
      %p381 = scmp.le.s32.totalorder 2, %s19
      // Predicated region
      $region49: #{tpu_custom_call.1} parent=5 // pred_check
        %p382 = pneg %p381
      $region50: #{tpu_custom_call.1} parent=5 // pred_check_branch
        %384 = sbr.rel (%p382) target = $region52
      $region51: #{tpu_custom_call.1} parent=5 // pred_region
        %s385 = ssub.s32 %s19, 2
        // Predicated region
        $region53: #{tpu_custom_call.1} parent=51 // pred_check
          %p386 = pneg %p160
        $region54: #{tpu_custom_call.1} parent=51 // pred_check_branch
          %388 = sbr.rel (%p386) target = $region56
        $region55: #{tpu_custom_call.1} parent=51 // pred_region
          %s389 = sand.u32 %s145, 1
          %s390 = scalar_lea.sflag [#allocation4], %s389
          %s391 = sand.u32 %s145, 1
          %s392 = smul.addr %s391, 16
          %s393 = scalar_lea.vmem [#allocation7], %s392
          %395 = dma.done %s390, 256
        $region56: #{tpu_custom_call.1} parent=51 // pred_fallthru
          _
      $region52: #{tpu_custom_call.1} parent=5 // pred_fallthru
        _
    $region6: #{tpu_custom_call.1} parent=1 // loop_footer
      %s23 = sadd.s32 1, %s19
    $region7: #{tpu_custom_call.1} parent=1 // loop_footer_branch
      %18 = sbr.rel target = $region3
    $region8: #{tpu_custom_call.1} parent=1 // loop_exit
      _
    %396 = vsyncpa [#allocation3], 1
    %s397 = scalar_lea.sflag [#allocation3], 1
    %398 = vsyncpa %s397, 1
    %399 = vsyncpa [#allocation6], 1
    %s400 = scalar_lea.sflag [#allocation6], 1
    %401 = vsyncpa %s400, 1
    %402 = vsyncpa [#allocation4], 1
    %s403 = scalar_lea.sflag [#allocation4], 1
    %404 = vsyncpa %s403, 1

</llo_original>
